<compile_context>
chip_gen: v6e
topology: v6e:2x2x1
jax: 0.10.0
libtpu: 0.0.40
codegen_flags: <defaults>
</compile_context>

<pallas_src>
import functools

import jax
import jax.numpy as jnp
from jax.experimental import pallas as pl
from jax.experimental.pallas import tpu as pltpu


# ----------------------------------------------------------------------------
# Pallas kernel
# ----------------------------------------------------------------------------

def _downsample_kernel(p_ref, w_ref, b_ref, o_ref, *, neg_slope):
    """One (image, pixel-tile) step: y = LeakyReLU(W @ patches + b).

    p_ref: (1, K, TP)    bf16 im2col patches; K = 4*C_in, TP pixels on lanes
    w_ref: (Cout, K)     bf16 conv weight (resident across the grid)
    b_ref: (Cout, 1)     f32 bias
    o_ref: (1, Cout, TP) f32 output block (free reshape to NCHW afterwards)
    """
    y = jnp.dot(w_ref[...], p_ref[0], preferred_element_type=jnp.float32)
    y = y + b_ref[...]
    o_ref[0] = jnp.where(y >= 0.0, y, neg_slope * y)


# ----------------------------------------------------------------------------
# Tiling / VMEM budgeting
# ----------------------------------------------------------------------------

def _vmem_need(tile, K, Cout):
    # double-buffered patch + output blocks, plus the resident bf16 weight
    return 2 * tile * (K * 2 + Cout * 4) + Cout * K * 2


def _pick_pixel_tile(P, K, Cout, budget_bytes=40 * 1024 * 1024):
    """Largest lane-dense tile of the per-image pixel axis fitting the budget."""
    for t in (4096, 2048, 1024, 512, 384, 256, 128):
        if P % t == 0 and _vmem_need(t, K, Cout) <= budget_bytes:
            return t
    # Small feature map (or no 128-multiple divisor): one tile per image.
    # TODO(synk): pad the pixel axis to a multiple of 128 if P is ever both
    # large and coprime with 128; UNet-style shapes never hit that case.
    return P


# ----------------------------------------------------------------------------
# JAX wrapper
# ----------------------------------------------------------------------------

def downsample(x, weight, bias, *, negative_slope=0.01):
    """x: (N, C_in, H, W) f32; weight: (C_out, C_in, 2, 2); bias: (C_out,).

    Returns (N, C_out, H//2, W//2) f32 == Conv2d(k=2, s=2) + LeakyReLU.
    """
    N, Cin, H, W = x.shape
    Cout = weight.shape[0]
    OH, OW = H // 2, W // 2        # floor semantics (PyTorch k=2/s=2)
    P = OH * OW
    K = 4 * Cin

    x = x[:, :, :2 * OH, :2 * OW]

    # Fused bf16 cast + im2col: a single XLA transpose fusion, the only extra
    # HBM pass on the input, at half the bytes of the previous f32 producer.
    # k = cin*4 + dy*2 + dx; per-image pixel index m = oh*OW + ow.
    xb = x.astype(jnp.bfloat16).reshape(N, Cin, OH, 2, OW, 2)
    patches = xb.transpose(0, 1, 3, 5, 2, 4).reshape(N, K, P)

    wk = weight.reshape(Cout, K).astype(jnp.bfloat16)   # same (cin, dy, dx) order
    bk = bias.astype(jnp.float32).reshape(Cout, 1)

    tile = _pick_pixel_tile(P, K, Cout)
    grid = (N, P // tile)

    vmem_need = _vmem_need(tile, K, Cout)
    vmem_limit = int(min(max(vmem_need + (16 << 20), 32 << 20), 56 << 20))

    cost = pl.CostEstimate(
        flops=2 * N * P * Cout * K,
        transcendentals=0,
        bytes_accessed=N * K * P * 2 + N * Cout * P * 4 + Cout * K * 2 + Cout * 4,
    )

    out = pl.pallas_call(
        functools.partial(_downsample_kernel, neg_slope=negative_slope),
        out_shape=jax.ShapeDtypeStruct((N, Cout, P), jnp.float32),
        grid=grid,
        in_specs=[
            pl.BlockSpec((1, K, tile), lambda n, t: (n, 0, t)),
            pl.BlockSpec((Cout, K), lambda n, t: (0, 0)),
            pl.BlockSpec((Cout, 1), lambda n, t: (0, 0)),
        ],
        out_specs=pl.BlockSpec((1, Cout, tile), lambda n, t: (n, 0, t)),
        compiler_params=pltpu.CompilerParams(
            dimension_semantics=("parallel", "parallel"),
            vmem_limit_bytes=vmem_limit,
        ),
        cost_estimate=cost,
    )(patches, wk, bk)

    # (N, Cout, OH*OW) -> (N, Cout, OH, OW): contiguous, free (no HBM copy).
    return out.reshape(N, Cout, OH, OW)


# ----------------------------------------------------------------------------
# Demo / self-check
# ----------------------------------------------------------------------------

if __name__ == "__main__":
    key = jax.random.PRNGKey(0)
    kx, kw, kb = jax.random.split(key, 3)

    N, Cin, H, W, Cout = 2, 4, 16, 16, 32
    bound = 1.0 / (Cin * 2 * 2) ** 0.5                  # PyTorch-style init bound
    x = jax.random.normal(kx, (N, Cin, H, W), jnp.float32)
    w = jax.random.uniform(kw, (Cout, Cin, 2, 2), jnp.float32, -bound, bound)
    b = jax.random.uniform(kb, (Cout,), jnp.float32, -bound, bound)

    out = jax.jit(downsample)(x, w, b)
    jax.block_until_ready(out)
    assert out.shape == (N, Cout, H // 2, W // 2), out.shape
    assert bool(jnp.all(jnp.isfinite(out)))

    # f32 reference (bf16 MXU operands -> loose tolerance, documented choice).
    ref = jax.lax.conv_general_dilated(
        x, w, window_strides=(2, 2), padding="VALID",
        dimension_numbers=("NCHW", "OIHW", "NCHW"))
    ref = ref + b.reshape(1, Cout, 1, 1)
    ref = jnp.where(ref >= 0.0, ref, 0.01 * ref)
    max_err = float(jnp.max(jnp.abs(out - ref)))
    assert bool(jnp.allclose(out, ref, atol=3e-2, rtol=3e-2)), max_err

    print("KERNEL_OK")
</pallas_src>

<mosaic_0001>
module attributes {stable_mosaic.version = 11 : i64} {
  func.func @_downsample_kernel(%arg0: i32, %arg1: i32, %arg2: memref<1x16x64xbf16, #tpu.memory_space<vmem>>, %arg3: memref<32x16xbf16, #tpu.memory_space<vmem>>, %arg4: memref<32x1xf32, #tpu.memory_space<vmem>>, %arg5: memref<1x32x64xf32, #tpu.memory_space<vmem>>) attributes {dimension_semantics = [#tpu.dimension_semantics<parallel>, #tpu.dimension_semantics<parallel>], iteration_bounds = array<i64: 2, 1>, scalar_prefetch = 0 : i64, scratch_operands = 0 : i64, tpu.core_type = #tpu.core_type<tc>, window_params = [{transform_indices = @transform_0, window_bounds = array<i64: 1, 16, 64>}, {pipeline_mode = #tpu.pipeline_mode<synchronous>, transform_indices = @transform_1, window_bounds = array<i64: 32, 16>}, {pipeline_mode = #tpu.pipeline_mode<synchronous>, transform_indices = @transform_2, window_bounds = array<i64: 32, 1>}, {transform_indices = @transform_3, window_bounds = array<i64: 1, 32, 64>}]} {
    %c0 = arith.constant 0 : index
    %c0_0 = arith.constant 0 : index
    %0 = vector.load %arg3[%c0, %c0_0] : memref<32x16xbf16, #tpu.memory_space<vmem>>, vector<32x16xbf16>
    %c0_1 = arith.constant 0 : index
    %c0_2 = arith.constant 0 : index
    %c0_3 = arith.constant 0 : index
    %1 = vector.load %arg2[%c0_1, %c0_2, %c0_3] : memref<1x16x64xbf16, #tpu.memory_space<vmem>>, vector<1x16x64xbf16>
    %2 = vector.shape_cast %1 : vector<1x16x64xbf16> to vector<16x64xbf16>
    %cst = arith.constant dense<0.000000e+00> : vector<32x64xf32>
    %3 = tpu.matmul %0, %2, %cst {dimension_numbers = #tpu.dot_dimension_numbers<[1], [0], [0], [1], [0, 0, 1, 1], [], []>} : vector<32x16xbf16>, vector<16x64xbf16>, vector<32x64xf32> -> vector<32x64xf32>
    %c0_4 = arith.constant 0 : index
    %c0_5 = arith.constant 0 : index
    %4 = vector.load %arg4[%c0_4, %c0_5] : memref<32x1xf32, #tpu.memory_space<vmem>>, vector<32x1xf32>
    %5 = vector.broadcast %4 : vector<32x1xf32> to vector<32x64xf32>
    %6 = arith.addf %3, %5 : vector<32x64xf32>
    %cst_6 = arith.constant 0.000000e+00 : f32
    %7 = vector.broadcast %cst_6 : f32 to vector<32x64xf32>
    %8 = arith.cmpf oge, %6, %7 : vector<32x64xf32>
    %cst_7 = arith.constant 0.00999999977 : f32
    %9 = vector.broadcast %cst_7 : f32 to vector<32x64xf32>
    %10 = arith.mulf %9, %6 : vector<32x64xf32>
    %11 = arith.select %8, %6, %10 : vector<32x64xi1>, vector<32x64xf32>
    %c0_8 = arith.constant 0 : index
    %c0_9 = arith.constant 0 : index
    %c0_10 = arith.constant 0 : index
    %12 = vector.load %arg5[%c0_8, %c0_9, %c0_10] : memref<1x32x64xf32, #tpu.memory_space<vmem>>, vector<1x32x64xf32>
    %13 = vector.shape_cast %12 : vector<1x32x64xf32> to vector<32x64xf32>
    %14 = vector.shape_cast %11 : vector<32x64xf32> to vector<1x32x64xf32>
    tpu.vector_store %arg5[%c0_8, %c0_9, %c0_10], %14 {strides = array<i32>} : memref<1x32x64xf32, #tpu.memory_space<vmem>>, vector<1x32x64xf32>,
    return
  }
  func.func @transform_0(%arg0: i32, %arg1: i32) -> (i32, i32, i32) {
    %c0_i32 = arith.constant 0 : i32
    %c0_i32_0 = arith.constant 0 : i32
    return %arg0, %c0_i32, %arg1 : i32, i32, i32
  }
  func.func @transform_1(%arg0: i32, %arg1: i32) -> (i32, i32) {
    %c0_i32 = arith.constant 0 : i32
    %c0_i32_0 = arith.constant 0 : i32
    %c0_i32_1 = arith.constant 0 : i32
    return %c0_i32, %c0_i32_0 : i32, i32
  }
  func.func @transform_2(%arg0: i32, %arg1: i32) -> (i32, i32) {
    %c0_i32 = arith.constant 0 : i32
    %c0_i32_0 = arith.constant 0 : i32
    %c0_i32_1 = arith.constant 0 : i32
    return %c0_i32, %c0_i32_0 : i32, i32
  }
  func.func @transform_3(%arg0: i32, %arg1: i32) -> (i32, i32, i32) {
    %c0_i32 = arith.constant 0 : i32
    %c0_i32_0 = arith.constant 0 : i32
    return %arg0, %c0_i32, %arg1 : i32, i32, i32
  }
}

</mosaic_0001>

<llo_original>
// kernel: downsample.1
$region0: #{downsample.1}
  #allocation0 [shape = 'u32[]', space=smem, size = 0x4, offset = 0x4, fixed_abs, tag = 'smem constant byte address 0x4 - core index']
  #allocation1 [shape = 'u32[144,128]{1,0:T(1,128)}', space=vmem, size = 0x12000, scoped, tag = 'internal scratch']
  %s0 = inlined_call_operand.vmem [shape: bf16[2,16,64], index: 0, kind: input, shape index: {}]
  %s1 = inlined_call_operand.vmem [shape: bf16[32,16], index: 1, kind: input, shape index: {}]
  %s2 = inlined_call_operand.vmem [shape: f32[32,1], index: 2, kind: input, shape index: {}]
  %s3 = inlined_call_operand.vmem [shape: f32[2,32,64], index: 3, kind: output, shape index: {}]
  %s4 = sld [smem:[#allocation0]]
  $region45: #{downsample.1} parent=0
    _
  %s6 = ssub.s32 1, %s4
  %s7 = scalar_select 0, %s6, %s4
  loop: start=0, step=1, limit=4
  $region2: #{downsample.1} parent=0 // loop_pre_header
    _
  $region3: #{downsample.1} parent=0 // loop_header
    %s9 = sphi 0, %s13
    %p10 = scmp.ge.s32.totalorder %s9, 4
    %s16 = sphi 0, %s28
    %s17 = sphi 0, %s24
    %s18 = sphi 0, %s16
    %s19 = sphi 0, %s17
    %s20 = sphi 0, %s18
    %s21 = sphi 0, %s19
    %s33 = sphi 0, %s35
    %s36 = sphi 0, %s33
    %s37 = sphi 0, %s36
    %s53 = sphi 0, %s37
    %s57 = sphi 0, %s57
    %s59 = sphi 0, %s57
    %s60 = sphi 0, %s59
    %s74 = sphi 0, %s60
    %s78 = sphi 0, %s78
    %s80 = sphi 0, %s78
    %s81 = sphi 0, %s80
    %s95 = sphi 0, %s81
    %s103 = sphi 0, %s105
    %s106 = sphi 0, %s103
    %s107 = sphi 0, %s106
    %s123 = sphi 0, %s107
  $region4: #{downsample.1} parent=0 // loop_header_branch
    %12 = sbr.rel (%p10) target = $region8
  $region5: #{downsample.1} parent=0 // loop_body
    %s14 = ssub.s32 %s9, 1
    %s15 = ssub.s32 %s9, 2
    %s22 = sadd.s32 1, %s17
    %p23 = scmp.ge.s32.totalorder %s22, 1
    %s24 = scalar_select %p23, 0, %s22
    %s25 = sadd.s32 1, %s16
    %s26 = scalar_select %p23, %s25, %s16
    %p27 = scmp.ge.s32.totalorder %s26, 2
    %s28 = scalar_select %p27, 0, %s26
    %s29 = ssub.s32 %s16, %s28
    %s30 = ssub.s32 %s17, %s24
    %s31 = sor.u32 %s29, %s30
    %p32 = scmp.eq.s32.totalorder %s31, 0
    %s34 = sadd.s32 %s33, 1
    %s35 = scalar_select %p32, %s33, %s34
    %p38 = pneg %p32
    %p39 = scmp.eq.s32.totalorder %s9, 1
    %p40 = por %p38, %p39
    %p41 = scmp.ne.s32.totalorder %s33, %s36
    %p42 = scmp.eq.s32.totalorder %s9, 0
    %p43 = por %p41, %p42
    %p44 = scmp.ne.s32.totalorder %s33, %s36
    %p45 = scmp.eq.s32.totalorder %s14, 1
    %p46 = por %p44, %p45
    %p47 = scmp.ne.s32.totalorder %s36, %s37
    %p48 = scmp.eq.s32.totalorder %s14, 0
    %p49 = por %p47, %p48
    %p50 = scmp.ne.s32.totalorder %s36, %s37
    %p51 = scmp.eq.s32.totalorder %s15, 1
    %p52 = por %p50, %p51
    %p54 = scmp.ne.s32.totalorder %s37, %s53
    %p55 = scmp.eq.s32.totalorder %s15, 0
    %p56 = por %p54, %p55
    %s58 = sadd.s32 %s57, 1
    %p61 = scmp.eq.s32.totalorder %s9, 1
    %p62 = scmp.ne.s32.totalorder %s57, %s59
    %p63 = scmp.eq.s32.totalorder %s9, 0
    %p64 = por %p62, %p63
    %p65 = scmp.ne.s32.totalorder %s57, %s59
    %p66 = scmp.eq.s32.totalorder %s14, 1
    %p67 = por %p65, %p66
    %p68 = scmp.ne.s32.totalorder %s59, %s60
    %p69 = scmp.eq.s32.totalorder %s14, 0
    %p70 = por %p68, %p69
    %p71 = scmp.ne.s32.totalorder %s59, %s60
    %p72 = scmp.eq.s32.totalorder %s15, 1
    %p73 = por %p71, %p72
    %p75 = scmp.ne.s32.totalorder %s60, %s74
    %p76 = scmp.eq.s32.totalorder %s15, 0
    %p77 = por %p75, %p76
    %s79 = sadd.s32 %s78, 1
    %p82 = scmp.eq.s32.totalorder %s9, 1
    %p83 = scmp.ne.s32.totalorder %s78, %s80
    %p84 = scmp.eq.s32.totalorder %s9, 0
    %p85 = por %p83, %p84
    %p86 = scmp.ne.s32.totalorder %s78, %s80
    %p87 = scmp.eq.s32.totalorder %s14, 1
    %p88 = por %p86, %p87
    %p89 = scmp.ne.s32.totalorder %s80, %s81
    %p90 = scmp.eq.s32.totalorder %s14, 0
    %p91 = por %p89, %p90
    %p92 = scmp.ne.s32.totalorder %s80, %s81
    %p93 = scmp.eq.s32.totalorder %s15, 1
    %p94 = por %p92, %p93
    %p96 = scmp.ne.s32.totalorder %s81, %s95
    %p97 = scmp.eq.s32.totalorder %s15, 0
    %p98 = por %p96, %p97
    %s99 = ssub.s32 %s16, %s28
    %s100 = ssub.s32 %s17, %s24
    %s101 = sor.u32 %s99, %s100
    %p102 = scmp.eq.s32.totalorder %s101, 0
    %s104 = sadd.s32 %s103, 1
    %s105 = scalar_select %p102, %s103, %s104
    %p108 = pneg %p102
    %p109 = scmp.eq.s32.totalorder %s9, 1
    %p110 = por %p108, %p109
    %p111 = scmp.ne.s32.totalorder %s103, %s106
    %p112 = scmp.eq.s32.totalorder %s9, 0
    %p113 = por %p111, %p112
    %p114 = scmp.ne.s32.totalorder %s103, %s106
    %p115 = scmp.eq.s32.totalorder %s14, 1
    %p116 = por %p114, %p115
    %p117 = scmp.ne.s32.totalorder %s106, %s107
    %p118 = scmp.eq.s32.totalorder %s14, 0
    %p119 = por %p117, %p118
    %p120 = scmp.ne.s32.totalorder %s106, %s107
    %p121 = scmp.eq.s32.totalorder %s15, 1
    %p122 = por %p120, %p121
    %p124 = scmp.ne.s32.totalorder %s107, %s123
    %p125 = scmp.eq.s32.totalorder %s15, 0
    %p126 = por %p124, %p125
    %p127 = scmp.le.s32.totalorder 1, %s9
    %p128 = scmp.lt.s32.totalorder %s9, 3
    %p129 = pnand %p127, %p128
    %p130 = pneg %p129
    // Predicated region
    $region9: #{downsample.1} parent=5 // pred_check
      _
    $region10: #{downsample.1} parent=5 // pred_check_branch
      %132 = sbr.rel (%p129) target = $region12
    $region11: #{downsample.1} parent=5 // pred_region
      %s133 = ssub.s32 %s9, 1
      // Predicated region
      $region13: #{downsample.1} parent=11 // pred_check
        %p134 = pneg %p70
      $region14: #{downsample.1} parent=11 // pred_check_branch
        %136 = sbr.rel (%p134) target = $region16
      $region15: #{downsample.1} parent=11 // pred_region
        _
      $region16: #{downsample.1} parent=11 // pred_fallthru
        _
      // Predicated region
      $region17: #{downsample.1} parent=11 // pred_check
        %p137 = pneg %p91
      $region18: #{downsample.1} parent=11 // pred_check_branch
        %139 = sbr.rel (%p137) target = $region20
      $region19: #{downsample.1} parent=11 // pred_region
        _
      $region20: #{downsample.1} parent=11 // pred_fallthru
        _
    $region12: #{downsample.1} parent=5 // pred_fallthru
      _
    %p140 = scmp.lt.s32.totalorder %s9, 2
    // Predicated region
    $region21: #{downsample.1} parent=5 // pred_check
      %p141 = pneg %p140
    $region22: #{downsample.1} parent=5 // pred_check_branch
      %143 = sbr.rel (%p141) target = $region24
    $region23: #{downsample.1} parent=5 // pred_region
      // Predicated region
      $region25: #{downsample.1} parent=23 // pred_check
        %p144 = pneg %p43
      $region26: #{downsample.1} parent=23 // pred_check_branch
        %146 = sbr.rel (%p144) target = $region28
      $region27: #{downsample.1} parent=23 // pred_region
        %p147 = scmp.lt.s32.totalorder %s16, 1
        %s148 = scalar_select %p147, %s16, 1
        %p149 = scmp.lt.s32.totalorder %s17, 0
        %s150 = scalar_select %p149, %s17, 0
        %s151 = smul.addr %s148, 2
        %s152 = sadd.s32 %s150, %s151
        %s153 = smul.addr %s152, 4
        %s154 = scalar_lea.vmem %s0, %s153
      $region28: #{downsample.1} parent=23 // pred_fallthru
        _
    $region24: #{downsample.1} parent=5 // pred_fallthru
      _
    %p155 = scmp.le.s32.totalorder 1, %s9
    %p156 = scmp.lt.s32.totalorder %s9, 3
    %p157 = pnand %p155, %p156
    %p158 = pneg %p157
    // Predicated region
    $region29: #{downsample.1} parent=5 // pred_check
      _
    $region30: #{downsample.1} parent=5 // pred_check_branch
      %160 = sbr.rel (%p157) target = $region32
    $region31: #{downsample.1} parent=5 // pred_region
      %s161 = ssub.s32 %s9, 1
      %p162 = scmp.lt.s32.totalorder %s18, 1
      %s163 = scalar_select %p162, %s18, 1
      %p164 = scmp.lt.s32.totalorder %s19, 0
      %s165 = scalar_select %p164, %s19, 0
      %s166 = smul.addr %s163, 2
      %s167 = sadd.s32 %s165, %s166
      %s168 = smul.addr %s167, 4
      %s169 = scalar_lea.vmem %s0, %s168
      %p170 = pneg %p49
      %p171 = pneg %p46
      %p172 = pneg %p70
      %p173 = pneg %p67
      %p174 = pneg %p91
      %p175 = pneg %p88
      %p176 = pneg %p119
      %p177 = pneg %p116
      %p178 = scmp.lt.s32.totalorder %s18, 1
      %s179 = scalar_select %p178, %s18, 1
      %p180 = scmp.lt.s32.totalorder %s19, 0
      %s181 = scalar_select %p180, %s19, 0
      %s182 = smul.addr %s179, 4
      %s183 = sadd.s32 %s181, %s182
      %s184 = smul.addr %s183, 8
      %s185 = scalar_lea.vmem %s3, %s184
      %p186 = scmp.lt.s32.totalorder %s18, 1
      %s187 = scalar_select %p186, %s18, 1
      %p188 = scmp.lt.s32.totalorder %s19, 0
      %s189 = scalar_select %p188, %s19, 0
      %s190 = smul.addr %s187, 2
      %s191 = sadd.s32 %s189, %s190
      %s192 = smul.addr %s191, 4
      %s193 = scalar_lea.vmem %s0, %s192
      %p194 = scmp.lt.s32.totalorder %s18, 1
      %s195 = scalar_select %p194, %s18, 1
      %p196 = scmp.lt.s32.totalorder %s19, 0
      %s197 = scalar_select %p196, %s19, 0
      %s198 = smul.addr %s195, 4
      %s199 = sadd.s32 %s197, %s198
      %s200 = smul.addr %s199, 8
      %s201 = scalar_lea.vmem %s3, %s200
      %v203 = vld [vmem:[%s1] sm:$0xf]
      %v204 = vld [vmem:[%s1 + $0x4] sm:$0xf]
      %v205 = vld [vmem:[%s1 + $0x8] sm:$0xf]
      %v206 = vld [vmem:[%s1 + $0xc] sm:$0xf]
      %v207 = vld [vmem:[%s193] sm:$0xf]
      %v208 = vld [vmem:[%s193 + $0x4] sm:$0xf]
      %v209 = vld [vmem:[%s2] sm:$0xff]
      %v210 = vld [vmem:[%s2 + $0x8] sm:$0xff]
      %v211 = vld [vmem:[%s2 + $0x10] sm:$0xff]
      %v212 = vld [vmem:[%s2 + $0x18] sm:$0xff]
      %214 = vset.pattern.permute.xlu0 0
      %215 = vperm.xlu0 %214, %v209
      %v216 = vpop.permute.xlu0 %215
      %219 = vset.pattern.permute.xlu0 0
      %220 = vperm.xlu0 %219, %v210
      %v221 = vpop.permute.xlu0 %220
      %224 = vset.pattern.permute.xlu0 0
      %225 = vperm.xlu0 %224, %v211
      %v226 = vpop.permute.xlu0 %225
      %229 = vset.pattern.permute.xlu0 0
      %230 = vperm.xlu0 %229, %v212
      %v231 = vpop.permute.xlu0 %230
      %v237 = vunpack.c.l.b16 %v203
      %v238 = vunpack.c.l.b16 %v204
      %v239 = vunpack.c.l.b16 %v205
      %v240 = vunpack.c.l.b16 %v206
      %v241 = vpack.c.b16 %v238, %v237
      %v242 = vpack.c.b16 %v240, %v239
      %v245 = vunpack.c.l.b16 %v207
      %v246 = vunpack.c.l.b16 %v208
      %v247 = vpack.c.b16 %v246, %v245
      %vm249 = vcmask 130048
      %v251 = vsel %vm249, %v241, 0
      %v254 = vsel %vm249, %v242, 0
      %256 = vmatprep.subr.bf16.mxu0 0
      %257 = vmatpush1.bf16.msra.mxu0 0
      %258 = vmatprep.subr.bf16.mxu0 0
      %259 = vmatpush1.bf16.msra.mxu0 0
      %260 = vmatprep.subr.bf16.mxu0 0
      %261 = vmatpush1.bf16.msra.mxu0 0
      %262 = vmatprep.subr.bf16.mxu0 0
      %263 = vmatpush1.bf16.msra.mxu0 0
      %264 = vmatprep.subr.bf16.mxu0 0
      %265 = vmatpush1.bf16.msra.mxu0 0
      %266 = vmatprep.subr.bf16.mxu0 0
      %267 = vmatpush1.bf16.msra.mxu0 0
      %268 = vmatprep.subr.bf16.mxu0 0
      %269 = vmatpush1.bf16.msra.mxu0 0
      %270 = vmatprep.subr.bf16.mxu0 0
      %271 = vmatpush1.bf16.msra.mxu0 %v247
      %272 = vmatprep.subr.bf16.mxu0 0
      %273 = vmatpush2.bf16.msra.mxu0 0
      %274 = vmatprep.subr.bf16.mxu0 0
      %275 = vmatpush2.bf16.msra.mxu0 0
      %276 = vmatprep.subr.bf16.mxu0 0
      %277 = vmatpush2.bf16.msra.mxu0 0
      %278 = vmatprep.subr.bf16.mxu0 0
      %279 = vmatpush2.bf16.msra.mxu0 0
      %280 = vmatprep.subr.bf16.mxu0 0
      %281 = vmatpush2.bf16.msra.mxu0 0
      %282 = vmatprep.subr.bf16.mxu0 0
      %283 = vmatpush2.bf16.msra.mxu0 0
      %284 = vmatprep.subr.bf16.mxu0 0
      %285 = vmatpush2.bf16.msra.mxu0 0
      %286 = vmatprep.subr.bf16.mxu0 0
      %287 = vmatpush2.bf16.msra.mxu0 0
      %288 = vmatprep.mubr.bf16.mxu0 0
      %289 = vmatmul.mubr.bf16.gmra.mxu0 %v251
      %v290 = vpop.f32.mrf.mxu0
      %v291 = vadd.f32 %v216, %v290
      %v292 = vpop.f32.mrf.mxu0
      %v293 = vpop.f32.mrf.mxu0
      %v294 = vadd.f32 %v221, %v293
      %v295 = vpop.f32.mrf.mxu0
      %296 = vmatprep.mubr.bf16.mxu0 0
      %297 = vmatmul.mubr.bf16.gmra.mxu0 %v254
      %v298 = vpop.f32.mrf.mxu0
      %v299 = vadd.f32 %v226, %v298
      %v300 = vpop.f32.mrf.mxu0
      %v301 = vpop.f32.mrf.mxu0
      %v302 = vadd.f32 %v231, %v301
      %v303 = vpop.f32.mrf.mxu0
      %304 = vdwg.mxu0
      %vm305 = vcmp.ge.f32.partialorder %v291, 0.0
      %vm306 = vcmp.ge.f32.partialorder %v294, 0.0
      %vm307 = vcmp.ge.f32.partialorder %v299, 0.0
      %vm308 = vcmp.ge.f32.partialorder %v302, 0.0
      %v309 = vmul.f32 %v291, 0.01
      %v310 = vmul.f32 %v294, 0.01
      %v311 = vmul.f32 %v299, 0.01
      %v312 = vmul.f32 %v302, 0.01
      %v313 = vsel %vm305, %v291, %v309
      %v314 = vsel %vm306, %v294, %v310
      %v315 = vsel %vm307, %v299, %v311
      %v316 = vsel %vm308, %v302, %v312
      %vm317 = vcmask 523264
      %318 = vst.msk [vmem:[%s201] sm:$0xff] %vm317, %v313
      %319 = vst.msk [vmem:[%s201 + $0x8] sm:$0xff] %vm317, %v314
      %320 = vst.msk [vmem:[%s201 + $0x10] sm:$0xff] %vm317, %v315
      %321 = vst.msk [vmem:[%s201 + $0x18] sm:$0xff] %vm317, %v316
      %p322 = scmp.lt.s32.totalorder %s18, 1
      %s323 = scalar_select %p322, %s18, 1
      %p324 = scmp.lt.s32.totalorder %s19, 0
      %s325 = scalar_select %p324, %s19, 0
      %s326 = smul.addr %s323, 4
      %s327 = sadd.s32 %s325, %s326
      %s328 = smul.addr %s327, 8
      %s329 = scalar_lea.vmem %s3, %s328
      // Predicated region
      $region33: #{downsample.1} parent=31 // pred_check
        %p330 = pneg %p116
      $region34: #{downsample.1} parent=31 // pred_check_branch
        %332 = sbr.rel (%p330) target = $region36
      $region35: #{downsample.1} parent=31 // pred_region
        _
      $region36: #{downsample.1} parent=31 // pred_fallthru
        _
    $region32: #{downsample.1} parent=5 // pred_fallthru
      _
    %p333 = scmp.le.s32.totalorder 2, %s9
    // Predicated region
    $region37: #{downsample.1} parent=5 // pred_check
      %p334 = pneg %p333
    $region38: #{downsample.1} parent=5 // pred_check_branch
      %336 = sbr.rel (%p334) target = $region40
    $region39: #{downsample.1} parent=5 // pred_region
      %s337 = ssub.s32 %s9, 2
      // Predicated region
      $region41: #{downsample.1} parent=39 // pred_check
        %p338 = pneg %p122
      $region42: #{downsample.1} parent=39 // pred_check_branch
        %340 = sbr.rel (%p338) target = $region44
      $region43: #{downsample.1} parent=39 // pred_region
        %p341 = scmp.lt.s32.totalorder %s20, 1
        %s342 = scalar_select %p341, %s20, 1
        %p343 = scmp.lt.s32.totalorder %s21, 0
        %s344 = scalar_select %p343, %s21, 0
        %s345 = smul.addr %s342, 4
        %s346 = sadd.s32 %s344, %s345
        %s347 = smul.addr %s346, 8
        %s348 = scalar_lea.vmem %s3, %s347
      $region44: #{downsample.1} parent=39 // pred_fallthru
        _
    $region40: #{downsample.1} parent=5 // pred_fallthru
      _
  $region6: #{downsample.1} parent=0 // loop_footer
    %s13 = sadd.s32 1, %s9
  $region7: #{downsample.1} parent=0 // loop_footer_branch
    %8 = sbr.rel target = $region3
  $region8: #{downsample.1} parent=0 // loop_exit
    _

</llo_original>
